<compile_context>
chip_gen: v6e
topology: v6e:2x2x1
jax: 0.10.0
libtpu: 0.0.40
codegen_flags: <defaults>
</compile_context>

<pallas_src>
import math
from functools import partial

import jax
import jax.numpy as jnp
from jax.experimental import pallas as pl
from jax.experimental.pallas import tpu as pltpu


def _mha_kernel(x_ref, w_qkv_ref, b_qkv_ref, w_out_ref, b_out_ref, o_ref,
                qkv_ref, ctx_ref,
                *, num_heads, head_dim, block_batch, seq_len):
    H, D, Bb, L = num_heads, head_dim, block_batch, seq_len
    E = H * D
    M = Bb * L
    scale = 1.0 / math.sqrt(D)
    cdt = w_qkv_ref.dtype            # MXU compute dtype (bf16 default, f32 optional)

    # All Bb*L rows of this batch block participate in every matmul.
    # (L % 8 == 0 keeps this reshape a pure leading/sublane regroup.)
    x2 = x_ref[...].reshape(M, E).astype(cdt)                             # (M, E)

    # Fused QKV projection: single full-width matmul, f32 accumulate, f32 bias.
    qkv_ref[...] = (jnp.dot(x2, w_qkv_ref[...],
                            preferred_element_type=jnp.float32)
                    + b_qkv_ref[...])                                     # (M, 3E) f32

    # Per-head attention; ctx_h lands in its column slice of the (M, E) context slab so the
    # output projection below is one full-depth matmul.  Static unroll: H is small here.
    for h in range(H):
        q = qkv_ref[:, h * D:(h + 1) * D].reshape(Bb, L, D).astype(cdt)
        k = qkv_ref[:, E + h * D:E + (h + 1) * D].reshape(Bb, L, D).astype(cdt)
        v = qkv_ref[:, 2 * E + h * D:2 * E + (h + 1) * D].reshape(Bb, L, D).astype(cdt)

        # Batched scaled-dot-product attention over the batch-block axis (f32 softmax).
        s = jnp.einsum("bqd,bkd->bqk", q, k,
                       preferred_element_type=jnp.float32) * scale       # (Bb, L, L)
        s = s - jnp.max(s, axis=-1, keepdims=True)
        p = jnp.exp(s)
        p = p * pl.reciprocal(jnp.sum(p, axis=-1, keepdims=True), approx=True)
        ctx = jnp.einsum("bqk,bkd->bqd", p.astype(cdt), v,
                         preferred_element_type=jnp.float32)              # (Bb, L, D)
        ctx_ref[:, h * D:(h + 1) * D] = ctx.reshape(M, D)

    # Fused output projection (== concat(heads) @ W_out^T + b_out).
    out = (jnp.dot(ctx_ref[...].astype(cdt), w_out_ref[...],
                   preferred_element_type=jnp.float32)
           + b_out_ref[...])                                              # (M, E) f32
    o_ref[...] = out.reshape(Bb, L, E).astype(o_ref.dtype)


def self_attention_pallas(x, w_in, b_in, w_out, b_out, *, num_heads,
                          block_batch=None, compute_dtype=jnp.bfloat16):
    """x: (B, L, E); w_in: (3E, E); b_in: (3E,); w_out: (E, E); b_out: (E,)."""
    B, L, E = x.shape
    H = num_heads
    assert E % H == 0
    D = E // H

    # Batch-block size: ~256 rows per grid step, but keep >= 2 grid steps when B >= 2 so
    # the "parallel" batch axis can be sharded across v7x's two TensorCores.
    if block_batch is None:
        block_batch = max(1, min(B, pl.cdiv(256, L)))
        if B >= 2 and pl.cdiv(B, block_batch) < 2:
            block_batch = pl.cdiv(B, 2)
    Bb = block_batch
    grid_b = pl.cdiv(B, Bb)

    # Non-dividing B: pad the batch (padded rows compute throwaway values and are sliced
    # away) instead of shrinking Bb to 1.
    B_pad = grid_b * Bb
    if B_pad != B:
        x = jnp.concatenate([x, jnp.zeros((B_pad - B, L, E), x.dtype)], axis=0)

    # Lane-dense weight layouts (3E / E on the lane dim), cast to the MXU compute dtype.
    # Columns of W_in^T are ordered [q | k | v], each grouped by head, so head h of q is
    # columns h*D:(h+1)*D -- matching the concat-by-head order of the output projection.
    w_qkv_t = jnp.asarray(w_in, jnp.float32).T.astype(compute_dtype)      # (E, 3E)
    b_qkv = jnp.asarray(b_in, jnp.float32).reshape(1, 3 * E)              # (1, 3E) f32
    w_out_t = jnp.asarray(w_out, jnp.float32).T.astype(compute_dtype)     # (E, E)
    b_out2 = jnp.asarray(b_out, jnp.float32).reshape(1, E)                # (1, E)  f32

    kernel = partial(_mha_kernel, num_heads=H, head_dim=D,
                     block_batch=Bb, seq_len=L)
    M = Bb * L

    out = pl.pallas_call(
        kernel,
        out_shape=jax.ShapeDtypeStruct((B_pad, L, E), x.dtype),
        grid_spec=pltpu.PrefetchScalarGridSpec(
            num_scalar_prefetch=0,
            grid=(grid_b,),
            in_specs=[
                pl.BlockSpec((Bb, L, E), lambda b: (b, 0, 0)),     # x batch block
                pl.BlockSpec((E, 3 * E), lambda b: (0, 0)),        # fused in_proj W^T
                pl.BlockSpec((1, 3 * E), lambda b: (0, 0)),        # in_proj bias
                pl.BlockSpec((E, E), lambda b: (0, 0)),            # out_proj W^T
                pl.BlockSpec((1, E), lambda b: (0, 0)),            # out_proj bias
            ],
            out_specs=pl.BlockSpec((Bb, L, E), lambda b: (b, 0, 0)),
            scratch_shapes=[
                pltpu.VMEM((M, 3 * E), jnp.float32),               # fused qkv slab
                pltpu.VMEM((M, E), jnp.float32),                   # per-head context slab
            ],
        ),
        compiler_params=pltpu.CompilerParams(
            dimension_semantics=("parallel",)),
    )(x, w_qkv_t, b_qkv, w_out_t, b_out2)

    return out[:B] if B_pad != B else out


def self_attention_ref(x, w_in, b_in, w_out, b_out, *, num_heads):
    """Pure-JAX reference of nn.MultiheadAttention forward (eval, Q=K=V=x, batch_first)."""
    B, L, E = x.shape
    D = E // num_heads
    qkv = jnp.einsum("ble,fe->blf", x, w_in) + b_in          # (B, L, 3E)
    q, k, v = jnp.split(qkv, 3, axis=-1)
    q = q.reshape(B, L, num_heads, D).transpose(0, 2, 1, 3)  # (B, H, L, D)
    k = k.reshape(B, L, num_heads, D).transpose(0, 2, 1, 3)
    v = v.reshape(B, L, num_heads, D).transpose(0, 2, 1, 3)
    s = jnp.einsum("bhqd,bhkd->bhqk", q, k) / math.sqrt(D)
    p = jax.nn.softmax(s, axis=-1)
    ctx = jnp.einsum("bhqk,bhkd->bhqd", p, v)                # (B, H, L, D)
    ctx = ctx.transpose(0, 2, 1, 3).reshape(B, L, E)
    return jnp.einsum("ble,fe->blf", ctx, w_out) + b_out


if __name__ == "__main__":
    # Small shapes consistent with the module: batch=2, seq=8, embed_dim=32, heads=4.
    B, L, E, H = 2, 8, 32, 4

    key = jax.random.PRNGKey(0)
    kx, k1, k2, k3, k4 = jax.random.split(key, 5)

    x = jax.random.normal(kx, (B, L, E), dtype=jnp.float32)

    # Deterministic parameter init (shapes match nn.MultiheadAttention's params).
    bound = 1.0 / math.sqrt(E)
    w_in = jax.random.uniform(k1, (3 * E, E), minval=-bound, maxval=bound,
                              dtype=jnp.float32)           # in_proj_weight
    b_in = jax.random.uniform(k2, (3 * E,), minval=-bound, maxval=bound,
                              dtype=jnp.float32)           # in_proj_bias
    w_out = jax.random.uniform(k3, (E, E), minval=-bound, maxval=bound,
                               dtype=jnp.float32)          # out_proj.weight
    b_out = jax.random.uniform(k4, (E,), minval=-bound, maxval=bound,
                               dtype=jnp.float32)          # out_proj.bias

    ref = self_attention_ref(x, w_in, b_in, w_out, b_out, num_heads=H)

    # Default path: bf16 MXU inputs, f32 accumulation / softmax.
    out_bf16 = jax.block_until_ready(
        self_attention_pallas(x, w_in, b_in, w_out, b_out, num_heads=H))
    assert out_bf16.shape == (B, L, E)
    assert jnp.allclose(out_bf16, ref, rtol=4e-2, atol=4e-2), \
        "bf16-path mismatch vs JAX reference"

    # f32 MXU path for tight parity (tolerance covers the EUP approximate reciprocal).
    out_f32 = jax.block_until_ready(
        self_attention_pallas(x, w_in, b_in, w_out, b_out, num_heads=H,
                              compute_dtype=jnp.float32))
    assert jnp.allclose(out_f32, ref, rtol=2e-3, atol=2e-3), \
        "f32-path mismatch vs JAX reference"

    print("KERNEL_OK")
</pallas_src>

<mosaic_0001>
module attributes {stable_mosaic.version = 11 : i64} {
  func.func @_mha_kernel(%arg0: i32, %arg1: memref<1x8x32xf32, #tpu.memory_space<vmem>>, %arg2: memref<32x96xbf16, #tpu.memory_space<vmem>>, %arg3: memref<1x96xf32, #tpu.memory_space<vmem>>, %arg4: memref<32x32xbf16, #tpu.memory_space<vmem>>, %arg5: memref<1x32xf32, #tpu.memory_space<vmem>>, %arg6: memref<1x8x32xf32, #tpu.memory_space<vmem>>, %arg7: memref<8x96xf32, #tpu.memory_space<vmem>>, %arg8: memref<8x32xf32, #tpu.memory_space<vmem>>) attributes {dimension_semantics = [#tpu.dimension_semantics<parallel>], iteration_bounds = array<i64: 2>, scalar_prefetch = 0 : i64, scratch_operands = 2 : i64, tpu.core_type = #tpu.core_type<tc>, window_params = [{transform_indices = @transform_0, window_bounds = array<i64: 1, 8, 32>}, {pipeline_mode = #tpu.pipeline_mode<synchronous>, transform_indices = @transform_1, window_bounds = array<i64: 32, 96>}, {pipeline_mode = #tpu.pipeline_mode<synchronous>, transform_indices = @transform_2, window_bounds = array<i64: 1, 96>}, {pipeline_mode = #tpu.pipeline_mode<synchronous>, transform_indices = @transform_3, window_bounds = array<i64: 32, 32>}, {pipeline_mode = #tpu.pipeline_mode<synchronous>, transform_indices = @transform_4, window_bounds = array<i64: 1, 32>}, {transform_indices = @transform_5, window_bounds = array<i64: 1, 8, 32>}]} {
    %c0 = arith.constant 0 : index
    %c0_0 = arith.constant 0 : index
    %c0_1 = arith.constant 0 : index
    %0 = vector.load %arg1[%c0, %c0_0, %c0_1] : memref<1x8x32xf32, #tpu.memory_space<vmem>>, vector<1x8x32xf32>
    %1 = vector.shape_cast %0 : vector<1x8x32xf32> to vector<8x32xf32>
    %2 = arith.truncf %1 : vector<8x32xf32> to vector<8x32xbf16>
    %c0_2 = arith.constant 0 : index
    %c0_3 = arith.constant 0 : index
    %3 = vector.load %arg2[%c0_2, %c0_3] : memref<32x96xbf16, #tpu.memory_space<vmem>>, vector<32x96xbf16>
    %cst = arith.constant dense<0.000000e+00> : vector<8x96xf32>
    %4 = tpu.matmul %2, %3, %cst {dimension_numbers = #tpu.dot_dimension_numbers<[1], [0], [0], [1], [0, 0, 1, 1], [], []>} : vector<8x32xbf16>, vector<32x96xbf16>, vector<8x96xf32> -> vector<8x96xf32>
    %c0_4 = arith.constant 0 : index
    %c0_5 = arith.constant 0 : index
    %5 = vector.load %arg3[%c0_4, %c0_5] : memref<1x96xf32, #tpu.memory_space<vmem>>, vector<1x96xf32>
    %6 = vector.broadcast %5 : vector<1x96xf32> to vector<8x96xf32>
    %7 = arith.addf %4, %6 : vector<8x96xf32>
    %c0_6 = arith.constant 0 : index
    %c0_7 = arith.constant 0 : index
    %8 = vector.load %arg7[%c0_6, %c0_7] : memref<8x96xf32, #tpu.memory_space<vmem>>, vector<8x96xf32>
    tpu.vector_store %arg7[%c0_6, %c0_7], %7 {strides = array<i32>} : memref<8x96xf32, #tpu.memory_space<vmem>>, vector<8x96xf32>,
    %c0_8 = arith.constant 0 : index
    %c0_9 = arith.constant 0 : index
    %9 = vector.load %arg7[%c0_8, %c0_9] : memref<8x96xf32, #tpu.memory_space<vmem>>, vector<8x8xf32>
    %10 = vector.shape_cast %9 : vector<8x8xf32> to vector<1x8x8xf32>
    %11 = arith.truncf %10 : vector<1x8x8xf32> to vector<1x8x8xbf16>
    %c0_10 = arith.constant 0 : index
    %c32 = arith.constant 32 : index
    %12 = vector.load %arg7[%c0_10, %c32] : memref<8x96xf32, #tpu.memory_space<vmem>>, vector<8x8xf32>
    %13 = vector.shape_cast %12 : vector<8x8xf32> to vector<1x8x8xf32>
    %14 = arith.truncf %13 : vector<1x8x8xf32> to vector<1x8x8xbf16>
    %c0_11 = arith.constant 0 : index
    %c64 = arith.constant 64 : index
    %15 = vector.load %arg7[%c0_11, %c64] : memref<8x96xf32, #tpu.memory_space<vmem>>, vector<8x8xf32>
    %16 = vector.shape_cast %15 : vector<8x8xf32> to vector<1x8x8xf32>
    %17 = arith.truncf %16 : vector<1x8x8xf32> to vector<1x8x8xbf16>
    "tpu.trace_start"() <{level = 10 : i32, message = "bqd,bkd->bqk"}> : () -> ()
    %cst_12 = arith.constant dense<0.000000e+00> : vector<1x8x8xf32>
    %18 = tpu.matmul %11, %14, %cst_12 {dimension_numbers = #tpu.dot_dimension_numbers<[2], [2], [1], [1], [0, 0, 0, 1, 1, 1], [0], [0]>} : vector<1x8x8xbf16>, vector<1x8x8xbf16>, vector<1x8x8xf32> -> vector<1x8x8xf32>
    "tpu.trace_stop"() : () -> ()
    %cst_13 = arith.constant 0.353553385 : f32
    %19 = vector.broadcast %cst_13 : f32 to vector<1x8x8xf32>
    %20 = arith.mulf %18, %19 : vector<1x8x8xf32>
    %cst_14 = arith.constant dense<0xFF800000> : vector<1x8xf32>
    %21 = vector.multi_reduction <maximumf>, %20, %cst_14 [2] : vector<1x8x8xf32> to vector<1x8xf32>
    %22 = vector.shape_cast %21 : vector<1x8xf32> to vector<1x8x1xf32>
    %23 = vector.broadcast %22 : vector<1x8x1xf32> to vector<1x8x8xf32>
    %24 = arith.subf %20, %23 : vector<1x8x8xf32>
    %25 = math.exp %24 : vector<1x8x8xf32>
    %cst_15 = arith.constant dense<0.000000e+00> : vector<1x8xf32>
    %26 = vector.multi_reduction <add>, %25, %cst_15 [2] : vector<1x8x8xf32> to vector<1x8xf32>
    %27 = vector.shape_cast %26 : vector<1x8xf32> to vector<1x8x1xf32>
    %28 = tpu.reciprocal %27 {approx = true} : vector<1x8x1xf32> -> vector<1x8x1xf32>
    %29 = vector.broadcast %28 : vector<1x8x1xf32> to vector<1x8x8xf32>
    %30 = arith.mulf %25, %29 : vector<1x8x8xf32>
    %31 = arith.truncf %30 : vector<1x8x8xf32> to vector<1x8x8xbf16>
    "tpu.trace_start"() <{level = 10 : i32, message = "bqk,bkd->bqd"}> : () -> ()
    %cst_16 = arith.constant dense<0.000000e+00> : vector<1x8x8xf32>
    %32 = tpu.matmul %31, %17, %cst_16 {dimension_numbers = #tpu.dot_dimension_numbers<[2], [1], [1], [2], [0, 0, 0, 1, 1, 2], [0], [0]>} : vector<1x8x8xbf16>, vector<1x8x8xbf16>, vector<1x8x8xf32> -> vector<1x8x8xf32>
    "tpu.trace_stop"() : () -> ()
    %33 = vector.shape_cast %32 : vector<1x8x8xf32> to vector<8x8xf32>
    %c0_17 = arith.constant 0 : index
    %c0_18 = arith.constant 0 : index
    %34 = vector.load %arg8[%c0_17, %c0_18] : memref<8x32xf32, #tpu.memory_space<vmem>>, vector<8x8xf32>
    tpu.vector_store %arg8[%c0_17, %c0_18], %33 {strides = array<i32>} : memref<8x32xf32, #tpu.memory_space<vmem>>, vector<8x8xf32>,
    %c0_19 = arith.constant 0 : index
    %c8 = arith.constant 8 : index
    %35 = vector.load %arg7[%c0_19, %c8] : memref<8x96xf32, #tpu.memory_space<vmem>>, vector<8x8xf32>
    %36 = vector.shape_cast %35 : vector<8x8xf32> to vector<1x8x8xf32>
    %37 = arith.truncf %36 : vector<1x8x8xf32> to vector<1x8x8xbf16>
    %c0_20 = arith.constant 0 : index
    %c40 = arith.constant 40 : index
    %38 = vector.load %arg7[%c0_20, %c40] : memref<8x96xf32, #tpu.memory_space<vmem>>, vector<8x8xf32>
    %39 = vector.shape_cast %38 : vector<8x8xf32> to vector<1x8x8xf32>
    %40 = arith.truncf %39 : vector<1x8x8xf32> to vector<1x8x8xbf16>
    %c0_21 = arith.constant 0 : index
    %c72 = arith.constant 72 : index
    %41 = vector.load %arg7[%c0_21, %c72] : memref<8x96xf32, #tpu.memory_space<vmem>>, vector<8x8xf32>
    %42 = vector.shape_cast %41 : vector<8x8xf32> to vector<1x8x8xf32>
    %43 = arith.truncf %42 : vector<1x8x8xf32> to vector<1x8x8xbf16>
    "tpu.trace_start"() <{level = 10 : i32, message = "bqd,bkd->bqk"}> : () -> ()
    %cst_22 = arith.constant dense<0.000000e+00> : vector<1x8x8xf32>
    %44 = tpu.matmul %37, %40, %cst_22 {dimension_numbers = #tpu.dot_dimension_numbers<[2], [2], [1], [1], [0, 0, 0, 1, 1, 1], [0], [0]>} : vector<1x8x8xbf16>, vector<1x8x8xbf16>, vector<1x8x8xf32> -> vector<1x8x8xf32>
    "tpu.trace_stop"() : () -> ()
    %cst_23 = arith.constant 0.353553385 : f32
    %45 = vector.broadcast %cst_23 : f32 to vector<1x8x8xf32>
    %46 = arith.mulf %44, %45 : vector<1x8x8xf32>
    %cst_24 = arith.constant dense<0xFF800000> : vector<1x8xf32>
    %47 = vector.multi_reduction <maximumf>, %46, %cst_24 [2] : vector<1x8x8xf32> to vector<1x8xf32>
    %48 = vector.shape_cast %47 : vector<1x8xf32> to vector<1x8x1xf32>
    %49 = vector.broadcast %48 : vector<1x8x1xf32> to vector<1x8x8xf32>
    %50 = arith.subf %46, %49 : vector<1x8x8xf32>
    %51 = math.exp %50 : vector<1x8x8xf32>
    %cst_25 = arith.constant dense<0.000000e+00> : vector<1x8xf32>
    %52 = vector.multi_reduction <add>, %51, %cst_25 [2] : vector<1x8x8xf32> to vector<1x8xf32>
    %53 = vector.shape_cast %52 : vector<1x8xf32> to vector<1x8x1xf32>
    %54 = tpu.reciprocal %53 {approx = true} : vector<1x8x1xf32> -> vector<1x8x1xf32>
    %55 = vector.broadcast %54 : vector<1x8x1xf32> to vector<1x8x8xf32>
    %56 = arith.mulf %51, %55 : vector<1x8x8xf32>
    %57 = arith.truncf %56 : vector<1x8x8xf32> to vector<1x8x8xbf16>
    "tpu.trace_start"() <{level = 10 : i32, message = "bqk,bkd->bqd"}> : () -> ()
    %cst_26 = arith.constant dense<0.000000e+00> : vector<1x8x8xf32>
    %58 = tpu.matmul %57, %43, %cst_26 {dimension_numbers = #tpu.dot_dimension_numbers<[2], [1], [1], [2], [0, 0, 0, 1, 1, 2], [0], [0]>} : vector<1x8x8xbf16>, vector<1x8x8xbf16>, vector<1x8x8xf32> -> vector<1x8x8xf32>
    "tpu.trace_stop"() : () -> ()
    %59 = vector.shape_cast %58 : vector<1x8x8xf32> to vector<8x8xf32>
    %c0_27 = arith.constant 0 : index
    %c8_28 = arith.constant 8 : index
    %60 = vector.load %arg8[%c0_27, %c8_28] : memref<8x32xf32, #tpu.memory_space<vmem>>, vector<8x8xf32>
    tpu.vector_store %arg8[%c0_27, %c8_28], %59 {strides = array<i32>} : memref<8x32xf32, #tpu.memory_space<vmem>>, vector<8x8xf32>,
    %c0_29 = arith.constant 0 : index
    %c16 = arith.constant 16 : index
    %61 = vector.load %arg7[%c0_29, %c16] : memref<8x96xf32, #tpu.memory_space<vmem>>, vector<8x8xf32>
    %62 = vector.shape_cast %61 : vector<8x8xf32> to vector<1x8x8xf32>
    %63 = arith.truncf %62 : vector<1x8x8xf32> to vector<1x8x8xbf16>
    %c0_30 = arith.constant 0 : index
    %c48 = arith.constant 48 : index
    %64 = vector.load %arg7[%c0_30, %c48] : memref<8x96xf32, #tpu.memory_space<vmem>>, vector<8x8xf32>
    %65 = vector.shape_cast %64 : vector<8x8xf32> to vector<1x8x8xf32>
    %66 = arith.truncf %65 : vector<1x8x8xf32> to vector<1x8x8xbf16>
    %c0_31 = arith.constant 0 : index
    %c80 = arith.constant 80 : index
    %67 = vector.load %arg7[%c0_31, %c80] : memref<8x96xf32, #tpu.memory_space<vmem>>, vector<8x8xf32>
    %68 = vector.shape_cast %67 : vector<8x8xf32> to vector<1x8x8xf32>
    %69 = arith.truncf %68 : vector<1x8x8xf32> to vector<1x8x8xbf16>
    "tpu.trace_start"() <{level = 10 : i32, message = "bqd,bkd->bqk"}> : () -> ()
    %cst_32 = arith.constant dense<0.000000e+00> : vector<1x8x8xf32>
    %70 = tpu.matmul %63, %66, %cst_32 {dimension_numbers = #tpu.dot_dimension_numbers<[2], [2], [1], [1], [0, 0, 0, 1, 1, 1], [0], [0]>} : vector<1x8x8xbf16>, vector<1x8x8xbf16>, vector<1x8x8xf32> -> vector<1x8x8xf32>
    "tpu.trace_stop"() : () -> ()
    %cst_33 = arith.constant 0.353553385 : f32
    %71 = vector.broadcast %cst_33 : f32 to vector<1x8x8xf32>
    %72 = arith.mulf %70, %71 : vector<1x8x8xf32>
    %cst_34 = arith.constant dense<0xFF800000> : vector<1x8xf32>
    %73 = vector.multi_reduction <maximumf>, %72, %cst_34 [2] : vector<1x8x8xf32> to vector<1x8xf32>
    %74 = vector.shape_cast %73 : vector<1x8xf32> to vector<1x8x1xf32>
    %75 = vector.broadcast %74 : vector<1x8x1xf32> to vector<1x8x8xf32>
    %76 = arith.subf %72, %75 : vector<1x8x8xf32>
    %77 = math.exp %76 : vector<1x8x8xf32>
    %cst_35 = arith.constant dense<0.000000e+00> : vector<1x8xf32>
    %78 = vector.multi_reduction <add>, %77, %cst_35 [2] : vector<1x8x8xf32> to vector<1x8xf32>
    %79 = vector.shape_cast %78 : vector<1x8xf32> to vector<1x8x1xf32>
    %80 = tpu.reciprocal %79 {approx = true} : vector<1x8x1xf32> -> vector<1x8x1xf32>
    %81 = vector.broadcast %80 : vector<1x8x1xf32> to vector<1x8x8xf32>
    %82 = arith.mulf %77, %81 : vector<1x8x8xf32>
    %83 = arith.truncf %82 : vector<1x8x8xf32> to vector<1x8x8xbf16>
    "tpu.trace_start"() <{level = 10 : i32, message = "bqk,bkd->bqd"}> : () -> ()
    %cst_36 = arith.constant dense<0.000000e+00> : vector<1x8x8xf32>
    %84 = tpu.matmul %83, %69, %cst_36 {dimension_numbers = #tpu.dot_dimension_numbers<[2], [1], [1], [2], [0, 0, 0, 1, 1, 2], [0], [0]>} : vector<1x8x8xbf16>, vector<1x8x8xbf16>, vector<1x8x8xf32> -> vector<1x8x8xf32>
    "tpu.trace_stop"() : () -> ()
    %85 = vector.shape_cast %84 : vector<1x8x8xf32> to vector<8x8xf32>
    %c0_37 = arith.constant 0 : index
    %c16_38 = arith.constant 16 : index
    %86 = vector.load %arg8[%c0_37, %c16_38] : memref<8x32xf32, #tpu.memory_space<vmem>>, vector<8x8xf32>
    tpu.vector_store %arg8[%c0_37, %c16_38], %85 {strides = array<i32>} : memref<8x32xf32, #tpu.memory_space<vmem>>, vector<8x8xf32>,
    %c0_39 = arith.constant 0 : index
    %c24 = arith.constant 24 : index
    %87 = vector.load %arg7[%c0_39, %c24] : memref<8x96xf32, #tpu.memory_space<vmem>>, vector<8x8xf32>
    %88 = vector.shape_cast %87 : vector<8x8xf32> to vector<1x8x8xf32>
    %89 = arith.truncf %88 : vector<1x8x8xf32> to vector<1x8x8xbf16>
    %c0_40 = arith.constant 0 : index
    %c56 = arith.constant 56 : index
    %90 = vector.load %arg7[%c0_40, %c56] : memref<8x96xf32, #tpu.memory_space<vmem>>, vector<8x8xf32>
    %91 = vector.shape_cast %90 : vector<8x8xf32> to vector<1x8x8xf32>
    %92 = arith.truncf %91 : vector<1x8x8xf32> to vector<1x8x8xbf16>
    %c0_41 = arith.constant 0 : index
    %c88 = arith.constant 88 : index
    %93 = vector.load %arg7[%c0_41, %c88] : memref<8x96xf32, #tpu.memory_space<vmem>>, vector<8x8xf32>
    %94 = vector.shape_cast %93 : vector<8x8xf32> to vector<1x8x8xf32>
    %95 = arith.truncf %94 : vector<1x8x8xf32> to vector<1x8x8xbf16>
    "tpu.trace_start"() <{level = 10 : i32, message = "bqd,bkd->bqk"}> : () -> ()
    %cst_42 = arith.constant dense<0.000000e+00> : vector<1x8x8xf32>
    %96 = tpu.matmul %89, %92, %cst_42 {dimension_numbers = #tpu.dot_dimension_numbers<[2], [2], [1], [1], [0, 0, 0, 1, 1, 1], [0], [0]>} : vector<1x8x8xbf16>, vector<1x8x8xbf16>, vector<1x8x8xf32> -> vector<1x8x8xf32>
    "tpu.trace_stop"() : () -> ()
    %cst_43 = arith.constant 0.353553385 : f32
    %97 = vector.broadcast %cst_43 : f32 to vector<1x8x8xf32>
    %98 = arith.mulf %96, %97 : vector<1x8x8xf32>
    %cst_44 = arith.constant dense<0xFF800000> : vector<1x8xf32>
    %99 = vector.multi_reduction <maximumf>, %98, %cst_44 [2] : vector<1x8x8xf32> to vector<1x8xf32>
    %100 = vector.shape_cast %99 : vector<1x8xf32> to vector<1x8x1xf32>
    %101 = vector.broadcast %100 : vector<1x8x1xf32> to vector<1x8x8xf32>
    %102 = arith.subf %98, %101 : vector<1x8x8xf32>
    %103 = math.exp %102 : vector<1x8x8xf32>
    %cst_45 = arith.constant dense<0.000000e+00> : vector<1x8xf32>
    %104 = vector.multi_reduction <add>, %103, %cst_45 [2] : vector<1x8x8xf32> to vector<1x8xf32>
    %105 = vector.shape_cast %104 : vector<1x8xf32> to vector<1x8x1xf32>
    %106 = tpu.reciprocal %105 {approx = true} : vector<1x8x1xf32> -> vector<1x8x1xf32>
    %107 = vector.broadcast %106 : vector<1x8x1xf32> to vector<1x8x8xf32>
    %108 = arith.mulf %103, %107 : vector<1x8x8xf32>
    %109 = arith.truncf %108 : vector<1x8x8xf32> to vector<1x8x8xbf16>
    "tpu.trace_start"() <{level = 10 : i32, message = "bqk,bkd->bqd"}> : () -> ()
    %cst_46 = arith.constant dense<0.000000e+00> : vector<1x8x8xf32>
    %110 = tpu.matmul %109, %95, %cst_46 {dimension_numbers = #tpu.dot_dimension_numbers<[2], [1], [1], [2], [0, 0, 0, 1, 1, 2], [0], [0]>} : vector<1x8x8xbf16>, vector<1x8x8xbf16>, vector<1x8x8xf32> -> vector<1x8x8xf32>
    "tpu.trace_stop"() : () -> ()
    %111 = vector.shape_cast %110 : vector<1x8x8xf32> to vector<8x8xf32>
    %c0_47 = arith.constant 0 : index
    %c24_48 = arith.constant 24 : index
    %112 = vector.load %arg8[%c0_47, %c24_48] : memref<8x32xf32, #tpu.memory_space<vmem>>, vector<8x8xf32>
    tpu.vector_store %arg8[%c0_47, %c24_48], %111 {strides = array<i32>} : memref<8x32xf32, #tpu.memory_space<vmem>>, vector<8x8xf32>,
    %c0_49 = arith.constant 0 : index
    %c0_50 = arith.constant 0 : index
    %113 = vector.load %arg8[%c0_49, %c0_50] : memref<8x32xf32, #tpu.memory_space<vmem>>, vector<8x32xf32>
    %114 = arith.truncf %113 : vector<8x32xf32> to vector<8x32xbf16>
    %c0_51 = arith.constant 0 : index
    %c0_52 = arith.constant 0 : index
    %115 = vector.load %arg4[%c0_51, %c0_52] : memref<32x32xbf16, #tpu.memory_space<vmem>>, vector<32x32xbf16>
    %cst_53 = arith.constant dense<0.000000e+00> : vector<8x32xf32>
    %116 = tpu.matmul %114, %115, %cst_53 {dimension_numbers = #tpu.dot_dimension_numbers<[1], [0], [0], [1], [0, 0, 1, 1], [], []>} : vector<8x32xbf16>, vector<32x32xbf16>, vector<8x32xf32> -> vector<8x32xf32>
    %c0_54 = arith.constant 0 : index
    %c0_55 = arith.constant 0 : index
    %117 = vector.load %arg5[%c0_54, %c0_55] : memref<1x32xf32, #tpu.memory_space<vmem>>, vector<1x32xf32>
    %118 = vector.broadcast %117 : vector<1x32xf32> to vector<8x32xf32>
    %119 = arith.addf %116, %118 : vector<8x32xf32>
    %120 = vector.shape_cast %119 : vector<8x32xf32> to vector<1x8x32xf32>
    %c0_56 = arith.constant 0 : index
    %c0_57 = arith.constant 0 : index
    %c0_58 = arith.constant 0 : index
    %121 = vector.load %arg6[%c0_56, %c0_57, %c0_58] : memref<1x8x32xf32, #tpu.memory_space<vmem>>, vector<1x8x32xf32>
    tpu.vector_store %arg6[%c0_56, %c0_57, %c0_58], %120 {strides = array<i32>} : memref<1x8x32xf32, #tpu.memory_space<vmem>>, vector<1x8x32xf32>,
    return
  }
  func.func @transform_0(%arg0: i32) -> (i32, i32, i32) {
    %c0_i32 = arith.constant 0 : i32
    %c0_i32_0 = arith.constant 0 : i32
    %c0_i32_1 = arith.constant 0 : i32
    return %arg0, %c0_i32, %c0_i32_0 : i32, i32, i32
  }
  func.func @transform_1(%arg0: i32) -> (i32, i32) {
    %c0_i32 = arith.constant 0 : i32
    %c0_i32_0 = arith.constant 0 : i32
    %c0_i32_1 = arith.constant 0 : i32
    return %c0_i32, %c0_i32_0 : i32, i32
  }
  func.func @transform_2(%arg0: i32) -> (i32, i32) {
    %c0_i32 = arith.constant 0 : i32
    %c0_i32_0 = arith.constant 0 : i32
    %c0_i32_1 = arith.constant 0 : i32
    return %c0_i32, %c0_i32_0 : i32, i32
  }
  func.func @transform_3(%arg0: i32) -> (i32, i32) {
    %c0_i32 = arith.constant 0 : i32
    %c0_i32_0 = arith.constant 0 : i32
    %c0_i32_1 = arith.constant 0 : i32
    return %c0_i32, %c0_i32_0 : i32, i32
  }
  func.func @transform_4(%arg0: i32) -> (i32, i32) {
    %c0_i32 = arith.constant 0 : i32
    %c0_i32_0 = arith.constant 0 : i32
    %c0_i32_1 = arith.constant 0 : i32
    return %c0_i32, %c0_i32_0 : i32, i32
  }
  func.func @transform_5(%arg0: i32) -> (i32, i32, i32) {
    %c0_i32 = arith.constant 0 : i32
    %c0_i32_0 = arith.constant 0 : i32
    %c0_i32_1 = arith.constant 0 : i32
    return %arg0, %c0_i32, %c0_i32_0 : i32, i32, i32
  }
}

</mosaic_0001>

<llo_original>
// kernel: tpu_custom_call.1
$region0: #{tpu_custom_call.1}
  #allocation0 [shape = 'u32[]', space=smem, size = 0x4, offset = 0x4, fixed_abs, tag = 'smem constant byte address 0x4 - core index']
  #allocation1 [shape = 'u32[144,128]{1,0:T(1,128)}', space=vmem, size = 0x12000, scoped, tag = 'internal scratch']
  #allocation2 [shape = 'f32[8,96]{1,0:T(8,128)}', space=vmem, size = 0x1000, scoped, tag = 'scratch operand']
  #allocation3 [shape = 'f32[8,32]{1,0:T(8,128)}', space=vmem, size = 0x1000, scoped, tag = 'scratch operand']
  %s0 = inlined_call_operand.hbm [shape: f32[2,8,32], index: 0, kind: input, shape index: {}]
  %s1 = inlined_call_operand.hbm [shape: bf16[32,96], index: 1, kind: input, shape index: {}]
  %s2 = inlined_call_operand.vmem [shape: f32[1,96], index: 2, kind: input, shape index: {}]
  %s3 = inlined_call_operand.hbm [shape: bf16[32,32], index: 3, kind: input, shape index: {}]
  %s4 = inlined_call_operand.vmem [shape: f32[1,32], index: 4, kind: input, shape index: {}]
  %s5 = inlined_call_operand.hbm [shape: f32[2,8,32], index: 5, kind: output, shape index: {}]
  %s6 = sld [smem:[#allocation0]]
  $region65: #{tpu_custom_call.1} parent=0
    _
  %s8 = ssub.s32 1, %s6
  %s9 = scalar_select 0, %s8, %s6
  $region1: #{tpu_custom_call.1} parent=0
    #allocation4 [shape = 'u8[8192]{0}', space=vmem, size = 0x2000, scoped, tag = 'input window, operand 0']
    #allocation5 [shape = 's32[2]{0}', space=sflag, size = 0x8, scoped, tag = 'scoped memory for tpu_custom_call.1']
    #allocation6 [shape = 's32[2]{0}', space=sflag, size = 0x8, scoped, tag = 'scoped memory for tpu_custom_call.1']
    #allocation7 [shape = 'u8[8192]{0}', space=vmem, size = 0x2000, scoped, tag = 'input window, operand 1, single buffered']
    #allocation8 [shape = 's32[1]{0}', space=sflag, size = 0x4, scoped, tag = 'scoped memory for tpu_custom_call.1']
    #allocation9 [shape = 'u8[8192]{0}', space=vmem, size = 0x2000, scoped, tag = 'input window, operand 3, single buffered']
    #allocation10 [shape = 'u8[8192]{0}', space=vmem, size = 0x2000, scoped, tag = 'output window, operand 0']
    %10 = vsyncpa [#allocation5], 0
    %s11 = scalar_lea.sflag [#allocation5], 1
    %12 = vsyncpa %s11, 0
    %13 = vsyncpa [#allocation8], 0
    %14 = vsyncpa [#allocation6], 0
    %s15 = scalar_lea.sflag [#allocation6], 1
    %16 = vsyncpa %s15, 0
    loop: start=0, step=1, limit=4
    $region2: #{tpu_custom_call.1} parent=1 // loop_pre_header
      _
    $region3: #{tpu_custom_call.1} parent=1 // loop_header
      %s18 = sphi 0, %s22
      %p19 = scmp.ge.s32.totalorder %s18, 4
      %s28 = sphi 0, %s30
      %s31 = sphi 0, %s28
      %s32 = sphi 0, %s31
      %s48 = sphi 0, %s32
      %s52 = sphi 0, %s52
      %s54 = sphi 0, %s52
      %s55 = sphi 0, %s54
      %s69 = sphi 0, %s55
      %s73 = sphi 0, %s73
      %s75 = sphi 0, %s73
      %s76 = sphi 0, %s75
      %s90 = sphi 0, %s76
      %s94 = sphi 0, %s94
      %s96 = sphi 0, %s94
      %s97 = sphi 0, %s96
      %s111 = sphi 0, %s97
      %s115 = sphi 0, %s115
      %s117 = sphi 0, %s115
      %s118 = sphi 0, %s117
      %s132 = sphi 0, %s118
      %s138 = sphi 0, %s140
      %s141 = sphi 0, %s138
      %s142 = sphi 0, %s141
      %s158 = sphi 0, %s142
    $region4: #{tpu_custom_call.1} parent=1 // loop_header_branch
      %21 = sbr.rel (%p19) target = $region8
    $region5: #{tpu_custom_call.1} parent=1 // loop_body
      %s23 = ssub.s32 %s18, 1
      %s24 = ssub.s32 %s18, 2
      %s25 = sadd.s32 %s18, 1
      %s26 = ssub.s32 %s18, %s25
      %p27 = scmp.eq.s32.totalorder %s26, 0
      %s29 = sadd.s32 %s28, 1
      %s30 = scalar_select %p27, %s28, %s29
      %p33 = pneg %p27
      %p34 = scmp.eq.s32.totalorder %s18, 1
      %p35 = por %p33, %p34
      %p36 = scmp.ne.s32.totalorder %s28, %s31
      %p37 = scmp.eq.s32.totalorder %s18, 0
      %p38 = por %p36, %p37
      %p39 = scmp.ne.s32.totalorder %s28, %s31
      %p40 = scmp.eq.s32.totalorder %s23, 1
      %p41 = por %p39, %p40
      %p42 = scmp.ne.s32.totalorder %s31, %s32
      %p43 = scmp.eq.s32.totalorder %s23, 0
      %p44 = por %p42, %p43
      %p45 = scmp.ne.s32.totalorder %s31, %s32
      %p46 = scmp.eq.s32.totalorder %s24, 1
      %p47 = por %p45, %p46
      %p49 = scmp.ne.s32.totalorder %s32, %s48
      %p50 = scmp.eq.s32.totalorder %s24, 0
      %p51 = por %p49, %p50
      %s53 = sadd.s32 %s52, 1
      %p56 = scmp.eq.s32.totalorder %s18, 1
      %p57 = scmp.ne.s32.totalorder %s52, %s54
      %p58 = scmp.eq.s32.totalorder %s18, 0
      %p59 = por %p57, %p58
      %p60 = scmp.ne.s32.totalorder %s52, %s54
      %p61 = scmp.eq.s32.totalorder %s23, 1
      %p62 = por %p60, %p61
      %p63 = scmp.ne.s32.totalorder %s54, %s55
      %p64 = scmp.eq.s32.totalorder %s23, 0
      %p65 = por %p63, %p64
      %p66 = scmp.ne.s32.totalorder %s54, %s55
      %p67 = scmp.eq.s32.totalorder %s24, 1
      %p68 = por %p66, %p67
      %p70 = scmp.ne.s32.totalorder %s55, %s69
      %p71 = scmp.eq.s32.totalorder %s24, 0
      %p72 = por %p70, %p71
      %s74 = sadd.s32 %s73, 1
      %p77 = scmp.eq.s32.totalorder %s18, 1
      %p78 = scmp.ne.s32.totalorder %s73, %s75
      %p79 = scmp.eq.s32.totalorder %s18, 0
      %p80 = por %p78, %p79
      %p81 = scmp.ne.s32.totalorder %s73, %s75
      %p82 = scmp.eq.s32.totalorder %s23, 1
      %p83 = por %p81, %p82
      %p84 = scmp.ne.s32.totalorder %s75, %s76
      %p85 = scmp.eq.s32.totalorder %s23, 0
      %p86 = por %p84, %p85
      %p87 = scmp.ne.s32.totalorder %s75, %s76
      %p88 = scmp.eq.s32.totalorder %s24, 1
      %p89 = por %p87, %p88
      %p91 = scmp.ne.s32.totalorder %s76, %s90
      %p92 = scmp.eq.s32.totalorder %s24, 0
      %p93 = por %p91, %p92
      %s95 = sadd.s32 %s94, 1
      %p98 = scmp.eq.s32.totalorder %s18, 1
      %p99 = scmp.ne.s32.totalorder %s94, %s96
      %p100 = scmp.eq.s32.totalorder %s18, 0
      %p101 = por %p99, %p100
      %p102 = scmp.ne.s32.totalorder %s94, %s96
      %p103 = scmp.eq.s32.totalorder %s23, 1
      %p104 = por %p102, %p103
      %p105 = scmp.ne.s32.totalorder %s96, %s97
      %p106 = scmp.eq.s32.totalorder %s23, 0
      %p107 = por %p105, %p106
      %p108 = scmp.ne.s32.totalorder %s96, %s97
      %p109 = scmp.eq.s32.totalorder %s24, 1
      %p110 = por %p108, %p109
      %p112 = scmp.ne.s32.totalorder %s97, %s111
      %p113 = scmp.eq.s32.totalorder %s24, 0
      %p114 = por %p112, %p113
      %s116 = sadd.s32 %s115, 1
      %p119 = scmp.eq.s32.totalorder %s18, 1
      %p120 = scmp.ne.s32.totalorder %s115, %s117
      %p121 = scmp.eq.s32.totalorder %s18, 0
      %p122 = por %p120, %p121
      %p123 = scmp.ne.s32.totalorder %s115, %s117
      %p124 = scmp.eq.s32.totalorder %s23, 1
      %p125 = por %p123, %p124
      %p126 = scmp.ne.s32.totalorder %s117, %s118
      %p127 = scmp.eq.s32.totalorder %s23, 0
      %p128 = por %p126, %p127
      %p129 = scmp.ne.s32.totalorder %s117, %s118
      %p130 = scmp.eq.s32.totalorder %s24, 1
      %p131 = por %p129, %p130
      %p133 = scmp.ne.s32.totalorder %s118, %s132
      %p134 = scmp.eq.s32.totalorder %s24, 0
      %p135 = por %p133, %p134
      %s136 = ssub.s32 %s18, %s25
      %p137 = scmp.eq.s32.totalorder %s136, 0
      %s139 = sadd.s32 %s138, 1
      %s140 = scalar_select %p137, %s138, %s139
      %p143 = pneg %p137
      %p144 = scmp.eq.s32.totalorder %s18, 1
      %p145 = por %p143, %p144
      %p146 = scmp.ne.s32.totalorder %s138, %s141
      %p147 = scmp.eq.s32.totalorder %s18, 0
      %p148 = por %p146, %p147
      %p149 = scmp.ne.s32.totalorder %s138, %s141
      %p150 = scmp.eq.s32.totalorder %s23, 1
      %p151 = por %p149, %p150
      %p152 = scmp.ne.s32.totalorder %s141, %s142
      %p153 = scmp.eq.s32.totalorder %s23, 0
      %p154 = por %p152, %p153
      %p155 = scmp.ne.s32.totalorder %s141, %s142
      %p156 = scmp.eq.s32.totalorder %s24, 1
      %p157 = por %p155, %p156
      %p159 = scmp.ne.s32.totalorder %s142, %s158
      %p160 = scmp.eq.s32.totalorder %s24, 0
      %p161 = por %p159, %p160
      %p162 = scmp.le.s32.totalorder 1, %s18
      %p163 = scmp.lt.s32.totalorder %s18, 3
      %p164 = pnand %p162, %p163
      %p165 = pneg %p164
      // Predicated region
      $region9: #{tpu_custom_call.1} parent=5 // pred_check
        _
      $region10: #{tpu_custom_call.1} parent=5 // pred_check_branch
        %167 = sbr.rel (%p164) target = $region12
      $region11: #{tpu_custom_call.1} parent=5 // pred_region
        %s168 = ssub.s32 %s18, 1
        // Predicated region
        $region13: #{tpu_custom_call.1} parent=11 // pred_check
          %p169 = pneg %p65
        $region14: #{tpu_custom_call.1} parent=11 // pred_check_branch
          %171 = sbr.rel (%p169) target = $region16
        $region15: #{tpu_custom_call.1} parent=11 // pred_region
          %s173 = ssub.s32 256, 256
          %174 = vsyncadd [#allocation8], %s173
          %s175 = sshll.u32 [#allocation7], 4
          %s176 = int_to_ptr.vmem [resolvable:$true] %s175
          %181 = dma.hbm_to_vmem [thread:$0]  %s1, 256, %s176, [#allocation8], 64, 64, 4
        $region16: #{tpu_custom_call.1} parent=11 // pred_fallthru
          _
        // Predicated region
        $region17: #{tpu_custom_call.1} parent=11 // pred_check
          %p182 = pneg %p86
        $region18: #{tpu_custom_call.1} parent=11 // pred_check_branch
          %184 = sbr.rel (%p182) target = $region20
        $region19: #{tpu_custom_call.1} parent=11 // pred_region
          _
        $region20: #{tpu_custom_call.1} parent=11 // pred_fallthru
          _
        // Predicated region
        $region21: #{tpu_custom_call.1} parent=11 // pred_check
          %p185 = pneg %p107
        $region22: #{tpu_custom_call.1} parent=11 // pred_check_branch
          %187 = sbr.rel (%p185) target = $region24
        $region23: #{tpu_custom_call.1} parent=11 // pred_region
          %s189 = ssub.s32 256, 256
          %190 = vsyncadd [#allocation8], %s189
          %s191 = sshll.u32 [#allocation9], 4
          %s192 = int_to_ptr.vmem [resolvable:$true] %s191
          %197 = dma.hbm_to_vmem [thread:$0]  %s3, 256, %s192, [#allocation8], 64, 64, 4
        $region24: #{tpu_custom_call.1} parent=11 // pred_fallthru
          _
        // Predicated region
        $region25: #{tpu_custom_call.1} parent=11 // pred_check
          %p198 = pneg %p128
        $region26: #{tpu_custom_call.1} parent=11 // pred_check_branch
          %200 = sbr.rel (%p198) target = $region28
        $region27: #{tpu_custom_call.1} parent=11 // pred_region
          _
        $region28: #{tpu_custom_call.1} parent=11 // pred_fallthru
          _
      $region12: #{tpu_custom_call.1} parent=5 // pred_fallthru
        _
      %p201 = scmp.lt.s32.totalorder %s18, 2
      // Predicated region
      $region29: #{tpu_custom_call.1} parent=5 // pred_check
        %p202 = pneg %p201
      $region30: #{tpu_custom_call.1} parent=5 // pred_check_branch
        %204 = sbr.rel (%p202) target = $region32
      $region31: #{tpu_custom_call.1} parent=5 // pred_region
        // Predicated region
        $region33: #{tpu_custom_call.1} parent=31 // pred_check
          %p205 = pneg %p38
        $region34: #{tpu_custom_call.1} parent=31 // pred_check_branch
          %207 = sbr.rel (%p205) target = $region36
        $region35: #{tpu_custom_call.1} parent=31 // pred_region
          %s208 = sand.u32 %s28, 1
          %s209 = scalar_lea.sflag [#allocation5], %s208
          %s210 = sand.u32 %s28, 1
          %s211 = smul.addr %s210, 8
          %s212 = scalar_lea.vmem [#allocation4], %s211
          %s214 = ssub.s32 128, 128
          %215 = vsyncadd %s209, %s214
          %s216 = smul.addr %s18, 128
          %s217 = scalar_lea.hbm %s0, %s216
          %s219 = sshll.u32 %s212, 4
          %s220 = int_to_ptr.vmem [resolvable:$true] %s219
          %222 = dma.hbm_to_vmem [thread:$0]  %s217, 128, %s220, %s209
        $region36: #{tpu_custom_call.1} parent=31 // pred_fallthru
          _
      $region32: #{tpu_custom_call.1} parent=5 // pred_fallthru
        _
      %p223 = scmp.le.s32.totalorder 1, %s18
      %p224 = scmp.lt.s32.totalorder %s18, 3
      %p225 = pnand %p223, %p224
      %p226 = pneg %p225
      // Predicated region
      $region37: #{tpu_custom_call.1} parent=5 // pred_check
        _
      $region38: #{tpu_custom_call.1} parent=5 // pred_check_branch
        %228 = sbr.rel (%p225) target = $region40
      $region39: #{tpu_custom_call.1} parent=5 // pred_region
        %s229 = ssub.s32 %s18, 1
        %s230 = sand.u32 %s31, 1
        %s231 = scalar_lea.sflag [#allocation5], %s230
        %s232 = sand.u32 %s31, 1
        %s233 = smul.addr %s232, 8
        %s234 = scalar_lea.vmem [#allocation4], %s233
        // Predicated region
        $region41: #{tpu_custom_call.1} parent=39 // pred_check
          %p235 = pneg %p44
        $region42: #{tpu_custom_call.1} parent=39 // pred_check_branch
          %237 = sbr.rel (%p235) target = $region44
        $region43: #{tpu_custom_call.1} parent=39 // pred_region
          %238 = dma.done %s231, 128
        $region44: #{tpu_custom_call.1} parent=39 // pred_fallthru
          _
        // Predicated region
        $region45: #{tpu_custom_call.1} parent=39 // pred_check
          %p239 = pneg %p65
        $region46: #{tpu_custom_call.1} parent=39 // pred_check_branch
          %241 = sbr.rel (%p239) target = $region48
        $region47: #{tpu_custom_call.1} parent=39 // pred_region
          %242 = dma.done [#allocation8], 256
        $region48: #{tpu_custom_call.1} parent=39 // pred_fallthru
          _
        // Predicated region
        $region49: #{tpu_custom_call.1} parent=39 // pred_check
          %p243 = pneg %p107
        $region50: #{tpu_custom_call.1} parent=39 // pred_check_branch
          %245 = sbr.rel (%p243) target = $region52
        $region51: #{tpu_custom_call.1} parent=39 // pred_region
          %246 = dma.done [#allocation8], 256
        $region52: #{tpu_custom_call.1} parent=39 // pred_fallthru
          _
        %s247 = sand.u32 %s31, 1
        %s248 = scalar_lea.sflag [#allocation5], %s247
        %s249 = sand.u32 %s31, 1
        %s250 = smul.addr %s249, 8
        %s251 = scalar_lea.vmem [#allocation4], %s250
        %p252 = pneg %p44
        %p253 = pneg %p41
        %p254 = pneg %p65
        %p255 = pneg %p62
        %p256 = pneg %p86
        %p257 = pneg %p83
        %p258 = pneg %p107
        %p259 = pneg %p104
        %p260 = pneg %p128
        %p261 = pneg %p125
        %p262 = pneg %p154
        %p263 = pneg %p151
        %s264 = sand.u32 %s141, 1
        %s265 = scalar_lea.sflag [#allocation6], %s264
        %s266 = sand.u32 %s141, 1
        %s267 = smul.addr %s266, 8
        %s268 = scalar_lea.vmem [#allocation10], %s267
        %v270 = vld [vmem:[%s234] sm:$0xff]
        %v271 = vpack.c.bf16 %v270, %v270
        %v272 = vld [vmem:[#allocation7] sm:$0xf]
        %v273 = vld [vmem:[#allocation7 + $0x4] sm:$0xf]
        %v274 = vld [vmem:[#allocation7 + $0x8] sm:$0xf]
        %v275 = vld [vmem:[#allocation7 + $0xc] sm:$0xf]
        %v276 = vld [vmem:[%s2] sm:$0x1]
        %v278 = vlaneseq
        %v279 = vshrl.u32 %v278, 7
        %v280 = vsub.s32 0, %v279
        %v281 = vrot.slane %v276, %v280
        %v287 = vunpack.c.l.b16 %v272
        %v288 = vunpack.c.l.b16 %v273
        %v289 = vunpack.c.l.b16 %v274
        %v290 = vunpack.c.l.b16 %v275
        %v291 = vpack.c.b16 %v288, %v287
        %v292 = vpack.c.b16 %v290, %v289
        %vm295 = vcmask 261120
        %v297 = vsel %vm295, %v271, 0
        %299 = vmatprep.subr.bf16.mxu0 0
        %300 = vmatpush1.bf16.msra.mxu0 0
        %301 = vmatprep.subr.bf16.mxu0 0
        %302 = vmatpush1.bf16.msra.mxu0 0
        %303 = vmatprep.subr.bf16.mxu0 0
        %304 = vmatpush1.bf16.msra.mxu0 0
        %305 = vmatprep.subr.bf16.mxu0 0
        %306 = vmatpush1.bf16.msra.mxu0 0
        %307 = vmatprep.subr.bf16.mxu0 0
        %308 = vmatpush1.bf16.msra.mxu0 0
        %309 = vmatprep.subr.bf16.mxu0 0
        %310 = vmatpush1.bf16.msra.mxu0 0
        %311 = vmatprep.subr.bf16.mxu0 0
        %312 = vmatpush1.bf16.msra.mxu0 %v292
        %313 = vmatprep.subr.bf16.mxu0 0
        %314 = vmatpush1.bf16.msra.mxu0 %v291
        %315 = vmatprep.subr.bf16.mxu0 0
        %316 = vmatpush2.bf16.msra.mxu0 0
        %317 = vmatprep.subr.bf16.mxu0 0
        %318 = vmatpush2.bf16.msra.mxu0 0
        %319 = vmatprep.subr.bf16.mxu0 0
        %320 = vmatpush2.bf16.msra.mxu0 0
        %321 = vmatprep.subr.bf16.mxu0 0
        %322 = vmatpush2.bf16.msra.mxu0 0
        %323 = vmatprep.subr.bf16.mxu0 0
        %324 = vmatpush2.bf16.msra.mxu0 0
        %325 = vmatprep.subr.bf16.mxu0 0
        %326 = vmatpush2.bf16.msra.mxu0 0
        %327 = vmatprep.subr.bf16.mxu0 0
        %328 = vmatpush2.bf16.msra.mxu0 0
        %329 = vmatprep.subr.bf16.mxu0 0
        %330 = vmatpush2.bf16.msra.mxu0 0
        %331 = vmatprep.mubr.bf16.mxu0 0
        %332 = vmatmul.mubr.bf16.gmra.mxu0 %v297
        %v333 = vpop.f32.mrf.mxu0
        %v334 = vadd.f32 %v281, %v333
        %v335 = vpop.f32.mrf.mxu0
        %v336 = vpop.f32.mrf.mxu0
        %v337 = vpop.f32.mrf.mxu0
        %338 = vdwg.mxu0
        %vm339 = vcmask 785408
        %340 = vst.msk [vmem:[#allocation2] sm:$0xff] %vm339, %v334
        %v341 = vld [vmem:[#allocation2] sm:$0xff]
        %v342 = vpack.c.bf16 %v341, %v341
        %344 = vrot.lane.b32.xlu0 %v342, 96
        %v345 = vpop.permute.xlu0 %344
        %vm346 = vcmask 64512
        %v348 = vsel %vm346, %v342, 0
        %v351 = vsel %vm346, %v345, 0
        %353 = vmatprep.subr.bf16.mxu0 0
        %354 = vmatpush1.bf16.xpose.msra.mxu0 0
        %355 = vmatprep.subr.bf16.mxu0 0
        %356 = vmatpush1.bf16.xpose.msra.mxu0 0
        %357 = vmatprep.subr.bf16.mxu0 0
        %358 = vmatpush1.bf16.xpose.msra.mxu0 0
        %359 = vmatprep.subr.bf16.mxu0 0
        %360 = vmatpush1.bf16.xpose.msra.mxu0 0
        %361 = vmatprep.subr.bf16.mxu0 0
        %362 = vmatpush1.bf16.xpose.msra.mxu0 0
        %363 = vmatprep.subr.bf16.mxu0 0
        %364 = vmatpush1.bf16.xpose.msra.mxu0 0
        %365 = vmatprep.subr.bf16.mxu0 0
        %366 = vmatpush1.bf16.xpose.msra.mxu0 0
        %367 = vmatprep.subr.bf16.mxu0 0
        %368 = vmatpush1.bf16.xpose.msra.mxu0 %v351
        %369 = vmatprep.subr.bf16.mxu0 0
        %370 = vmatpush2.bf16.xpose.msra.mxu0 0
        %371 = vmatprep.subr.bf16.mxu0 0
        %372 = vmatpush2.bf16.xpose.msra.mxu0 0
        %373 = vmatprep.subr.bf16.mxu0 0
        %374 = vmatpush2.bf16.xpose.msra.mxu0 0
        %375 = vmatprep.subr.bf16.mxu0 0
        %376 = vmatpush2.bf16.xpose.msra.mxu0 0
        %377 = vmatprep.subr.bf16.mxu0 0
        %378 = vmatpush2.bf16.xpose.msra.mxu0 0
        %379 = vmatprep.subr.bf16.mxu0 0
        %380 = vmatpush2.bf16.xpose.msra.mxu0 0
        %381 = vmatprep.subr.bf16.mxu0 0
        %382 = vmatpush2.bf16.xpose.msra.mxu0 0
        %383 = vmatprep.subr.bf16.mxu0 0
        %384 = vmatpush2.bf16.xpose.msra.mxu0 0
        %385 = vmatprep.mubr.bf16.mxu0 0
        %386 = vmatmul.mubr.bf16.gmra.mxu0 %v348
        %v387 = vpop.f32.mrf.mxu0
        %v388 = vadd.f32 0.0, %v387
        %v389 = vpop.f32.mrf.mxu0
        %v390 = vpop.f32.mrf.mxu0
        %v391 = vpop.f32.mrf.mxu0
        %392 = vdwg.mxu0
        %v393 = vmul.f32 %v388, 0.35355338
        %v394 = vsel %vm346, %v393, -inf
        %395 = vmax.xlane.f32.xlu0 %v394
        %v396 = vpop.xlane.xlu0 %395
        %v397 = vsub.f32 %v393, %v396
        %v398 = vmul.f32 %v397, 1.442695
        %v399 = vpow.pop %v398
        %v400 = vsel %vm346, %v399, 0.0
        %401 = vadd.xlane.f32.xlu0 %v400
        %v402 = vpop.xlane.xlu0 %401
        %v403 = vrcp.pop %v402
        %v404 = vmul.f32 %v399, %v403
        %v405 = vpack.c.bf16 %v404, %v404
        %406 = vrot.lane.b32.xlu0 %v342, 64
        %v407 = vpop.permute.xlu0 %406
        %v409 = vsel %vm346, %v405, 0
        %vm411 = vcmask 1043456
        %v413 = vsel %vm411, %v407, 0
        %415 = vmatprep.subr.bf16.mxu0 0
        %416 = vmatpush1.bf16.msra.mxu0 0
        %417 = vmatprep.subr.bf16.mxu0 0
        %418 = vmatpush1.bf16.msra.mxu0 0
        %419 = vmatprep.subr.bf16.mxu0 0
        %420 = vmatpush1.bf16.msra.mxu0 0
        %421 = vmatprep.subr.bf16.mxu0 0
        %422 = vmatpush1.bf16.msra.mxu0 0
        %423 = vmatprep.subr.bf16.mxu0 0
        %424 = vmatpush1.bf16.msra.mxu0 0
        %425 = vmatprep.subr.bf16.mxu0 0
        %426 = vmatpush1.bf16.msra.mxu0 0
        %427 = vmatprep.subr.bf16.mxu0 0
        %428 = vmatpush1.bf16.msra.mxu0 0
        %429 = vmatprep.subr.bf16.mxu0 0
        %430 = vmatpush1.bf16.msra.mxu0 %v413
        %431 = vmatprep.subr.bf16.mxu0 0
        %432 = vmatpush2.bf16.msra.mxu0 0
        %433 = vmatprep.subr.bf16.mxu0 0
        %434 = vmatpush2.bf16.msra.mxu0 0
        %435 = vmatprep.subr.bf16.mxu0 0
        %436 = vmatpush2.bf16.msra.mxu0 0
        %437 = vmatprep.subr.bf16.mxu0 0
        %438 = vmatpush2.bf16.msra.mxu0 0
        %439 = vmatprep.subr.bf16.mxu0 0
        %440 = vmatpush2.bf16.msra.mxu0 0
        %441 = vmatprep.subr.bf16.mxu0 0
        %442 = vmatpush2.bf16.msra.mxu0 0
        %443 = vmatprep.subr.bf16.mxu0 0
        %444 = vmatpush2.bf16.msra.mxu0 0
        %445 = vmatprep.subr.bf16.mxu0 0
        %446 = vmatpush2.bf16.msra.mxu0 0
        %447 = vmatprep.mubr.bf16.mxu0 0
        %448 = vmatmul.mubr.bf16.gmra.mxu0 %v409
        %v449 = vpop.f32.mrf.mxu0
        %v450 = vadd.f32 0.0, %v449
        %v451 = vpop.f32.mrf.mxu0
        %v452 = vpop.f32.mrf.mxu0
        %v453 = vpop.f32.mrf.mxu0
        %454 = vdwg.mxu0
        %455 = vst.msk [vmem:[#allocation3] sm:$0xff] %vm346, %v450
        %v456 = vld [vmem:[#allocation2] sm:$0xff]
        %v457 = vpack.c.bf16 %v456, %v456
        %459 = vrot.lane.b32.xlu0 %v457, 120
        %v460 = vpop.permute.xlu0 %459
        %461 = vrot.lane.b32.xlu0 %v457, 88
        %v462 = vpop.permute.xlu0 %461
        %v464 = vsel %vm346, %v460, 0
        %v467 = vsel %vm346, %v462, 0
        %469 = vmatprep.subr.bf16.mxu0 0
        %470 = vmatpush1.bf16.xpose.msra.mxu0 0
        %471 = vmatprep.subr.bf16.mxu0 0
        %472 = vmatpush1.bf16.xpose.msra.mxu0 0
        %473 = vmatprep.subr.bf16.mxu0 0
        %474 = vmatpush1.bf16.xpose.msra.mxu0 0
        %475 = vmatprep.subr.bf16.mxu0 0
        %476 = vmatpush1.bf16.xpose.msra.mxu0 0
        %477 = vmatprep.subr.bf16.mxu0 0
        %478 = vmatpush1.bf16.xpose.msra.mxu0 0
        %479 = vmatprep.subr.bf16.mxu0 0
        %480 = vmatpush1.bf16.xpose.msra.mxu0 0
        %481 = vmatprep.subr.bf16.mxu0 0
        %482 = vmatpush1.bf16.xpose.msra.mxu0 0
        %483 = vmatprep.subr.bf16.mxu0 0
        %484 = vmatpush1.bf16.xpose.msra.mxu0 %v467
        %485 = vmatprep.subr.bf16.mxu0 0
        %486 = vmatpush2.bf16.xpose.msra.mxu0 0
        %487 = vmatprep.subr.bf16.mxu0 0
        %488 = vmatpush2.bf16.xpose.msra.mxu0 0
        %489 = vmatprep.subr.bf16.mxu0 0
        %490 = vmatpush2.bf16.xpose.msra.mxu0 0
        %491 = vmatprep.subr.bf16.mxu0 0
        %492 = vmatpush2.bf16.xpose.msra.mxu0 0
        %493 = vmatprep.subr.bf16.mxu0 0
        %494 = vmatpush2.bf16.xpose.msra.mxu0 0
        %495 = vmatprep.subr.bf16.mxu0 0
        %496 = vmatpush2.bf16.xpose.msra.mxu0 0
        %497 = vmatprep.subr.bf16.mxu0 0
        %498 = vmatpush2.bf16.xpose.msra.mxu0 0
        %499 = vmatprep.subr.bf16.mxu0 0
        %500 = vmatpush2.bf16.xpose.msra.mxu0 0
        %501 = vmatprep.mubr.bf16.mxu0 0
        %502 = vmatmul.mubr.bf16.gmra.mxu0 %v464
        %v503 = vpop.f32.mrf.mxu0
        %v504 = vadd.f32 0.0, %v503
        %v505 = vpop.f32.mrf.mxu0
        %v506 = vpop.f32.mrf.mxu0
        %v507 = vpop.f32.mrf.mxu0
        %508 = vdwg.mxu0
        %v509 = vmul.f32 %v504, 0.35355338
        %v510 = vsel %vm346, %v509, -inf
        %511 = vmax.xlane.f32.xlu0 %v510
        %v512 = vpop.xlane.xlu0 %511
        %v513 = vsub.f32 %v509, %v512
        %v514 = vmul.f32 %v513, 1.442695
        %v515 = vpow.pop %v514
        %v516 = vsel %vm346, %v515, 0.0
        %517 = vadd.xlane.f32.xlu0 %v516
        %v518 = vpop.xlane.xlu0 %517
        %v519 = vrcp.pop %v518
        %v520 = vmul.f32 %v515, %v519
        %v521 = vpack.c.bf16 %v520, %v520
        %522 = vrot.lane.b32.xlu0 %v457, 56
        %v523 = vpop.permute.xlu0 %522
        %v525 = vsel %vm346, %v521, 0
        %v528 = vsel %vm411, %v523, 0
        %530 = vmatprep.subr.bf16.mxu0 0
        %531 = vmatpush1.bf16.msra.mxu0 0
        %532 = vmatprep.subr.bf16.mxu0 0
        %533 = vmatpush1.bf16.msra.mxu0 0
        %534 = vmatprep.subr.bf16.mxu0 0
        %535 = vmatpush1.bf16.msra.mxu0 0
        %536 = vmatprep.subr.bf16.mxu0 0
        %537 = vmatpush1.bf16.msra.mxu0 0
        %538 = vmatprep.subr.bf16.mxu0 0
        %539 = vmatpush1.bf16.msra.mxu0 0
        %540 = vmatprep.subr.bf16.mxu0 0
        %541 = vmatpush1.bf16.msra.mxu0 0
        %542 = vmatprep.subr.bf16.mxu0 0
        %543 = vmatpush1.bf16.msra.mxu0 0
        %544 = vmatprep.subr.bf16.mxu0 0
        %545 = vmatpush1.bf16.msra.mxu0 %v528
        %546 = vmatprep.subr.bf16.mxu0 0
        %547 = vmatpush2.bf16.msra.mxu0 0
        %548 = vmatprep.subr.bf16.mxu0 0
        %549 = vmatpush2.bf16.msra.mxu0 0
        %550 = vmatprep.subr.bf16.mxu0 0
        %551 = vmatpush2.bf16.msra.mxu0 0
        %552 = vmatprep.subr.bf16.mxu0 0
        %553 = vmatpush2.bf16.msra.mxu0 0
        %554 = vmatprep.subr.bf16.mxu0 0
        %555 = vmatpush2.bf16.msra.mxu0 0
        %556 = vmatprep.subr.bf16.mxu0 0
        %557 = vmatpush2.bf16.msra.mxu0 0
        %558 = vmatprep.subr.bf16.mxu0 0
        %559 = vmatpush2.bf16.msra.mxu0 0
        %560 = vmatprep.subr.bf16.mxu0 0
        %561 = vmatpush2.bf16.msra.mxu0 0
        %562 = vmatprep.mubr.bf16.mxu0 0
        %563 = vmatmul.mubr.bf16.gmra.mxu0 %v525
        %v564 = vpop.f32.mrf.mxu0
        %v565 = vadd.f32 0.0, %v564
        %v566 = vpop.f32.mrf.mxu0
        %v567 = vpop.f32.mrf.mxu0
        %v568 = vpop.f32.mrf.mxu0
        %569 = vdwg.mxu0
        %571 = vrot.lane.b32.xlu0 %v565, 8
        %v572 = vpop.permute.xlu0 %571
        %vm574 = vcmask 130112
        %575 = vst.msk [vmem:[#allocation3] sm:$0xff] %vm574, %v572
        %v576 = vld [vmem:[#allocation2] sm:$0xff]
        %v577 = vpack.c.bf16 %v576, %v576
        %579 = vrot.lane.b32.xlu0 %v577, 112
        %v580 = vpop.permute.xlu0 %579
        %581 = vrot.lane.b32.xlu0 %v577, 80
        %v582 = vpop.permute.xlu0 %581
        %v584 = vsel %vm346, %v580, 0
        %v587 = vsel %vm346, %v582, 0
        %589 = vmatprep.subr.bf16.mxu0 0
        %590 = vmatpush1.bf16.xpose.msra.mxu0 0
        %591 = vmatprep.subr.bf16.mxu0 0
        %592 = vmatpush1.bf16.xpose.msra.mxu0 0
        %593 = vmatprep.subr.bf16.mxu0 0
        %594 = vmatpush1.bf16.xpose.msra.mxu0 0
        %595 = vmatprep.subr.bf16.mxu0 0
        %596 = vmatpush1.bf16.xpose.msra.mxu0 0
        %597 = vmatprep.subr.bf16.mxu0 0
        %598 = vmatpush1.bf16.xpose.msra.mxu0 0
        %599 = vmatprep.subr.bf16.mxu0 0
        %600 = vmatpush1.bf16.xpose.msra.mxu0 0
        %601 = vmatprep.subr.bf16.mxu0 0
        %602 = vmatpush1.bf16.xpose.msra.mxu0 0
        %603 = vmatprep.subr.bf16.mxu0 0
        %604 = vmatpush1.bf16.xpose.msra.mxu0 %v587
        %605 = vmatprep.subr.bf16.mxu0 0
        %606 = vmatpush2.bf16.xpose.msra.mxu0 0
        %607 = vmatprep.subr.bf16.mxu0 0
        %608 = vmatpush2.bf16.xpose.msra.mxu0 0
        %609 = vmatprep.subr.bf16.mxu0 0
        %610 = vmatpush2.bf16.xpose.msra.mxu0 0
        %611 = vmatprep.subr.bf16.mxu0 0
        %612 = vmatpush2.bf16.xpose.msra.mxu0 0
        %613 = vmatprep.subr.bf16.mxu0 0
        %614 = vmatpush2.bf16.xpose.msra.mxu0 0
        %615 = vmatprep.subr.bf16.mxu0 0
        %616 = vmatpush2.bf16.xpose.msra.mxu0 0
        %617 = vmatprep.subr.bf16.mxu0 0
        %618 = vmatpush2.bf16.xpose.msra.mxu0 0
        %619 = vmatprep.subr.bf16.mxu0 0
        %620 = vmatpush2.bf16.xpose.msra.mxu0 0
        %621 = vmatprep.mubr.bf16.mxu0 0
        %622 = vmatmul.mubr.bf16.gmra.mxu0 %v584
        %v623 = vpop.f32.mrf.mxu0
        %v624 = vadd.f32 0.0, %v623
        %v625 = vpop.f32.mrf.mxu0
        %v626 = vpop.f32.mrf.mxu0
        %v627 = vpop.f32.mrf.mxu0
        %628 = vdwg.mxu0
        %v629 = vmul.f32 %v624, 0.35355338
        %v630 = vsel %vm346, %v629, -inf
        %631 = vmax.xlane.f32.xlu0 %v630
        %v632 = vpop.xlane.xlu0 %631
        %v633 = vsub.f32 %v629, %v632
        %v634 = vmul.f32 %v633, 1.442695
        %v635 = vpow.pop %v634
        %v636 = vsel %vm346, %v635, 0.0
        %637 = vadd.xlane.f32.xlu0 %v636
        %v638 = vpop.xlane.xlu0 %637
        %v639 = vrcp.pop %v638
        %v640 = vmul.f32 %v635, %v639
        %v641 = vpack.c.bf16 %v640, %v640
        %642 = vrot.lane.b32.xlu0 %v577, 48
        %v643 = vpop.permute.xlu0 %642
        %v645 = vsel %vm346, %v641, 0
        %v648 = vsel %vm411, %v643, 0
        %650 = vmatprep.subr.bf16.mxu0 0
        %651 = vmatpush1.bf16.msra.mxu0 0
        %652 = vmatprep.subr.bf16.mxu0 0
        %653 = vmatpush1.bf16.msra.mxu0 0
        %654 = vmatprep.subr.bf16.mxu0 0
        %655 = vmatpush1.bf16.msra.mxu0 0
        %656 = vmatprep.subr.bf16.mxu0 0
        %657 = vmatpush1.bf16.msra.mxu0 0
        %658 = vmatprep.subr.bf16.mxu0 0
        %659 = vmatpush1.bf16.msra.mxu0 0
        %660 = vmatprep.subr.bf16.mxu0 0
        %661 = vmatpush1.bf16.msra.mxu0 0
        %662 = vmatprep.subr.bf16.mxu0 0
        %663 = vmatpush1.bf16.msra.mxu0 0
        %664 = vmatprep.subr.bf16.mxu0 0
        %665 = vmatpush1.bf16.msra.mxu0 %v648
        %666 = vmatprep.subr.bf16.mxu0 0
        %667 = vmatpush2.bf16.msra.mxu0 0
        %668 = vmatprep.subr.bf16.mxu0 0
        %669 = vmatpush2.bf16.msra.mxu0 0
        %670 = vmatprep.subr.bf16.mxu0 0
        %671 = vmatpush2.bf16.msra.mxu0 0
        %672 = vmatprep.subr.bf16.mxu0 0
        %673 = vmatpush2.bf16.msra.mxu0 0
        %674 = vmatprep.subr.bf16.mxu0 0
        %675 = vmatpush2.bf16.msra.mxu0 0
        %676 = vmatprep.subr.bf16.mxu0 0
        %677 = vmatpush2.bf16.msra.mxu0 0
        %678 = vmatprep.subr.bf16.mxu0 0
        %679 = vmatpush2.bf16.msra.mxu0 0
        %680 = vmatprep.subr.bf16.mxu0 0
        %681 = vmatpush2.bf16.msra.mxu0 0
        %682 = vmatprep.mubr.bf16.mxu0 0
        %683 = vmatmul.mubr.bf16.gmra.mxu0 %v645
        %v684 = vpop.f32.mrf.mxu0
        %v685 = vadd.f32 0.0, %v684
        %v686 = vpop.f32.mrf.mxu0
        %v687 = vpop.f32.mrf.mxu0
        %v688 = vpop.f32.mrf.mxu0
        %689 = vdwg.mxu0
        %691 = vrot.lane.b32.xlu0 %v685, 16
        %v692 = vpop.permute.xlu0 %691
        %vm694 = vcmask 195712
        %695 = vst.msk [vmem:[#allocation3] sm:$0xff] %vm694, %v692
        %v696 = vld [vmem:[#allocation2] sm:$0xff]
        %v697 = vpack.c.bf16 %v696, %v696
        %699 = vrot.lane.b32.xlu0 %v697, 104
        %v700 = vpop.permute.xlu0 %699
        %701 = vrot.lane.b32.xlu0 %v697, 72
        %v702 = vpop.permute.xlu0 %701
        %v704 = vsel %vm346, %v700, 0
        %v707 = vsel %vm346, %v702, 0
        %709 = vmatprep.subr.bf16.mxu0 0
        %710 = vmatpush1.bf16.xpose.msra.mxu0 0
        %711 = vmatprep.subr.bf16.mxu0 0
        %712 = vmatpush1.bf16.xpose.msra.mxu0 0
        %713 = vmatprep.subr.bf16.mxu0 0
        %714 = vmatpush1.bf16.xpose.msra.mxu0 0
        %715 = vmatprep.subr.bf16.mxu0 0
        %716 = vmatpush1.bf16.xpose.msra.mxu0 0
        %717 = vmatprep.subr.bf16.mxu0 0
        %718 = vmatpush1.bf16.xpose.msra.mxu0 0
        %719 = vmatprep.subr.bf16.mxu0 0
        %720 = vmatpush1.bf16.xpose.msra.mxu0 0
        %721 = vmatprep.subr.bf16.mxu0 0
        %722 = vmatpush1.bf16.xpose.msra.mxu0 0
        %723 = vmatprep.subr.bf16.mxu0 0
        %724 = vmatpush1.bf16.xpose.msra.mxu0 %v707
        %725 = vmatprep.subr.bf16.mxu0 0
        %726 = vmatpush2.bf16.xpose.msra.mxu0 0
        %727 = vmatprep.subr.bf16.mxu0 0
        %728 = vmatpush2.bf16.xpose.msra.mxu0 0
        %729 = vmatprep.subr.bf16.mxu0 0
        %730 = vmatpush2.bf16.xpose.msra.mxu0 0
        %731 = vmatprep.subr.bf16.mxu0 0
        %732 = vmatpush2.bf16.xpose.msra.mxu0 0
        %733 = vmatprep.subr.bf16.mxu0 0
        %734 = vmatpush2.bf16.xpose.msra.mxu0 0
        %735 = vmatprep.subr.bf16.mxu0 0
        %736 = vmatpush2.bf16.xpose.msra.mxu0 0
        %737 = vmatprep.subr.bf16.mxu0 0
        %738 = vmatpush2.bf16.xpose.msra.mxu0 0
        %739 = vmatprep.subr.bf16.mxu0 0
        %740 = vmatpush2.bf16.xpose.msra.mxu0 0
        %741 = vmatprep.mubr.bf16.mxu0 0
        %742 = vmatmul.mubr.bf16.gmra.mxu0 %v704
        %v743 = vpop.f32.mrf.mxu0
        %v744 = vadd.f32 0.0, %v743
        %v745 = vpop.f32.mrf.mxu0
        %v746 = vpop.f32.mrf.mxu0
        %v747 = vpop.f32.mrf.mxu0
        %748 = vdwg.mxu0
        %v749 = vmul.f32 %v744, 0.35355338
        %v750 = vsel %vm346, %v749, -inf
        %751 = vmax.xlane.f32.xlu0 %v750
        %v752 = vpop.xlane.xlu0 %751
        %v753 = vsub.f32 %v749, %v752
        %v754 = vmul.f32 %v753, 1.442695
        %v755 = vpow.pop %v754
        %v756 = vsel %vm346, %v755, 0.0
        %757 = vadd.xlane.f32.xlu0 %v756
        %v758 = vpop.xlane.xlu0 %757
        %v759 = vrcp.pop %v758
        %v760 = vmul.f32 %v755, %v759
        %v761 = vpack.c.bf16 %v760, %v760
        %762 = vrot.lane.b32.xlu0 %v697, 40
        %v763 = vpop.permute.xlu0 %762
        %v765 = vsel %vm346, %v761, 0
        %v768 = vsel %vm411, %v763, 0
        %770 = vmatprep.subr.bf16.mxu0 0
        %771 = vmatpush1.bf16.msra.mxu0 0
        %772 = vmatprep.subr.bf16.mxu0 0
        %773 = vmatpush1.bf16.msra.mxu0 0
        %774 = vmatprep.subr.bf16.mxu0 0
        %775 = vmatpush1.bf16.msra.mxu0 0
        %776 = vmatprep.subr.bf16.mxu0 0
        %777 = vmatpush1.bf16.msra.mxu0 0
        %778 = vmatprep.subr.bf16.mxu0 0
        %779 = vmatpush1.bf16.msra.mxu0 0
        %780 = vmatprep.subr.bf16.mxu0 0
        %781 = vmatpush1.bf16.msra.mxu0 0
        %782 = vmatprep.subr.bf16.mxu0 0
        %783 = vmatpush1.bf16.msra.mxu0 0
        %784 = vmatprep.subr.bf16.mxu0 0
        %785 = vmatpush1.bf16.msra.mxu0 %v768
        %786 = vmatprep.subr.bf16.mxu0 0
        %787 = vmatpush2.bf16.msra.mxu0 0
        %788 = vmatprep.subr.bf16.mxu0 0
        %789 = vmatpush2.bf16.msra.mxu0 0
        %790 = vmatprep.subr.bf16.mxu0 0
        %791 = vmatpush2.bf16.msra.mxu0 0
        %792 = vmatprep.subr.bf16.mxu0 0
        %793 = vmatpush2.bf16.msra.mxu0 0
        %794 = vmatprep.subr.bf16.mxu0 0
        %795 = vmatpush2.bf16.msra.mxu0 0
        %796 = vmatprep.subr.bf16.mxu0 0
        %797 = vmatpush2.bf16.msra.mxu0 0
        %798 = vmatprep.subr.bf16.mxu0 0
        %799 = vmatpush2.bf16.msra.mxu0 0
        %800 = vmatprep.subr.bf16.mxu0 0
        %801 = vmatpush2.bf16.msra.mxu0 0
        %802 = vmatprep.mubr.bf16.mxu0 0
        %803 = vmatmul.mubr.bf16.gmra.mxu0 %v765
        %v804 = vpop.f32.mrf.mxu0
        %v805 = vadd.f32 0.0, %v804
        %v806 = vpop.f32.mrf.mxu0
        %v807 = vpop.f32.mrf.mxu0
        %v808 = vpop.f32.mrf.mxu0
        %809 = vdwg.mxu0
        %811 = vrot.lane.b32.xlu0 %v805, 24
        %v812 = vpop.permute.xlu0 %811
        %vm814 = vcmask 261312
        %815 = vst.msk [vmem:[#allocation3] sm:$0xff] %vm814, %v812
        %v816 = vld [vmem:[#allocation3] sm:$0xff]
        %v817 = vpack.c.bf16 %v816, %v816
        %v818 = vld [vmem:[#allocation9] sm:$0xf]
        %v819 = vld [vmem:[#allocation9 + $0x4] sm:$0xf]
        %v820 = vld [vmem:[#allocation9 + $0x8] sm:$0xf]
        %v821 = vld [vmem:[#allocation9 + $0xc] sm:$0xf]
        %v822 = vld [vmem:[%s4] sm:$0x1]
        %v824 = vlaneseq
        %v825 = vshrl.u32 %v824, 7
        %v826 = vsub.s32 0, %v825
        %v827 = vrot.slane %v822, %v826
        %v833 = vunpack.c.l.b16 %v818
        %v834 = vunpack.c.l.b16 %v819
        %v835 = vunpack.c.l.b16 %v820
        %v836 = vunpack.c.l.b16 %v821
        %v837 = vpack.c.b16 %v834, %v833
        %v838 = vpack.c.b16 %v836, %v835
        %v842 = vsel %vm295, %v817, 0
        %844 = vmatprep.subr.bf16.mxu0 0
        %845 = vmatpush1.bf16.msra.mxu0 0
        %846 = vmatprep.subr.bf16.mxu0 0
        %847 = vmatpush1.bf16.msra.mxu0 0
        %848 = vmatprep.subr.bf16.mxu0 0
        %849 = vmatpush1.bf16.msra.mxu0 0
        %850 = vmatprep.subr.bf16.mxu0 0
        %851 = vmatpush1.bf16.msra.mxu0 0
        %852 = vmatprep.subr.bf16.mxu0 0
        %853 = vmatpush1.bf16.msra.mxu0 0
        %854 = vmatprep.subr.bf16.mxu0 0
        %855 = vmatpush1.bf16.msra.mxu0 0
        %856 = vmatprep.subr.bf16.mxu0 0
        %857 = vmatpush1.bf16.msra.mxu0 %v838
        %858 = vmatprep.subr.bf16.mxu0 0
        %859 = vmatpush1.bf16.msra.mxu0 %v837
        %860 = vmatprep.subr.bf16.mxu0 0
        %861 = vmatpush2.bf16.msra.mxu0 0
        %862 = vmatprep.subr.bf16.mxu0 0
        %863 = vmatpush2.bf16.msra.mxu0 0
        %864 = vmatprep.subr.bf16.mxu0 0
        %865 = vmatpush2.bf16.msra.mxu0 0
        %866 = vmatprep.subr.bf16.mxu0 0
        %867 = vmatpush2.bf16.msra.mxu0 0
        %868 = vmatprep.subr.bf16.mxu0 0
        %869 = vmatpush2.bf16.msra.mxu0 0
        %870 = vmatprep.subr.bf16.mxu0 0
        %871 = vmatpush2.bf16.msra.mxu0 0
        %872 = vmatprep.subr.bf16.mxu0 0
        %873 = vmatpush2.bf16.msra.mxu0 0
        %874 = vmatprep.subr.bf16.mxu0 0
        %875 = vmatpush2.bf16.msra.mxu0 0
        %876 = vmatprep.mubr.bf16.mxu0 0
        %877 = vmatmul.mubr.bf16.gmra.mxu0 %v842
        %v878 = vpop.f32.mrf.mxu0
        %v879 = vadd.f32 %v827, %v878
        %v880 = vpop.f32.mrf.mxu0
        %v881 = vpop.f32.mrf.mxu0
        %v882 = vpop.f32.mrf.mxu0
        %883 = vdwg.mxu0
        %884 = vst.msk [vmem:[%s268] sm:$0xff] %vm295, %v879
        %s885 = sand.u32 %s141, 1
        %s886 = scalar_lea.sflag [#allocation6], %s885
        %s887 = sand.u32 %s141, 1
        %s888 = smul.addr %s887, 8
        %s889 = scalar_lea.vmem [#allocation10], %s888
        // Predicated region
        $region53: #{tpu_custom_call.1} parent=39 // pred_check
          %p890 = pneg %p151
        $region54: #{tpu_custom_call.1} parent=39 // pred_check_branch
          %892 = sbr.rel (%p890) target = $region56
        $region55: #{tpu_custom_call.1} parent=39 // pred_region
          %s894 = ssub.s32 128, 128
          %895 = vsyncadd %s886, %s894
          %s896 = smul.addr %s23, 128
          %s897 = scalar_lea.hbm %s5, %s896
          %s899 = sshll.u32 %s889, 4
          %s900 = int_to_ptr.vmem [resolvable:$true] %s899
          %902 = dma.vmem_to_hbm [thread:$0]  %s900, 128, %s897, %s886
        $region56: #{tpu_custom_call.1} parent=39 // pred_fallthru
          _
      $region40: #{tpu_custom_call.1} parent=5 // pred_fallthru
        _
      %p903 = scmp.le.s32.totalorder 2, %s18
      // Predicated region
      $region57: #{tpu_custom_call.1} parent=5 // pred_check
        %p904 = pneg %p903
      $region58: #{tpu_custom_call.1} parent=5 // pred_check_branch
        %906 = sbr.rel (%p904) target = $region60
      $region59: #{tpu_custom_call.1} parent=5 // pred_region
        %s907 = ssub.s32 %s18, 2
        // Predicated region
        $region61: #{tpu_custom_call.1} parent=59 // pred_check
          %p908 = pneg %p157
        $region62: #{tpu_custom_call.1} parent=59 // pred_check_branch
          %910 = sbr.rel (%p908) target = $region64
        $region63: #{tpu_custom_call.1} parent=59 // pred_region
          %s911 = sand.u32 %s142, 1
          %s912 = scalar_lea.sflag [#allocation6], %s911
          %s913 = sand.u32 %s142, 1
          %s914 = smul.addr %s913, 8
          %s915 = scalar_lea.vmem [#allocation10], %s914
          %916 = dma.done %s912, 128
        $region64: #{tpu_custom_call.1} parent=59 // pred_fallthru
          _
      $region60: #{tpu_custom_call.1} parent=5 // pred_fallthru
        _
    $region6: #{tpu_custom_call.1} parent=1 // loop_footer
      %s22 = sadd.s32 1, %s18
    $region7: #{tpu_custom_call.1} parent=1 // loop_footer_branch
      %17 = sbr.rel target = $region3
    $region8: #{tpu_custom_call.1} parent=1 // loop_exit
      _
    %917 = vsyncpa [#allocation5], 1
    %s918 = scalar_lea.sflag [#allocation5], 1
    %919 = vsyncpa %s918, 1
    %920 = vsyncpa [#allocation8], 1
    %921 = vsyncpa [#allocation6], 1
    %s922 = scalar_lea.sflag [#allocation6], 1
    %923 = vsyncpa %s922, 1

</llo_original>
